<compile_context>
chip_gen: v7x
topology: tpu7x:2x2x1
jax: 0.10.0
libtpu: 0.0.40
codegen_flags: <defaults>
</compile_context>

<pallas_src>
import functools

import jax
import jax.numpy as jnp
from jax.experimental import pallas as pl
from jax.experimental.pallas import tpu as pltpu


# ---------------------------------------------------------------------------
# Activation dispatch (mirrors the nn.ModuleDict in the PyTorch module).
# ---------------------------------------------------------------------------
_ACTIVATIONS = {
    "identity": lambda x: x,
    "sigmoid": jax.nn.sigmoid,
    "tanh": jnp.tanh,
    "relu": jax.nn.relu,
    "lkrelu": lambda x: jax.nn.leaky_relu(x, negative_slope=0.01),
    "softplus": jax.nn.softplus,
    # tanh-approx GELU lowers cleanly on all TPU gens (EUP tanh).
    # TODO(synk): PyTorch nn.GELU default is the exact erf form.
    "gelu": functools.partial(jax.nn.gelu, approximate=True),
}
# Activations safe to evaluate in the stored (possibly bf16) dtype on the VPU.
_CHEAP_ACTS = ("identity", "relu", "lkrelu")


def _round_up(x, m):
    return (x + m - 1) // m * m


def _pick_tile(dim_padded, desired):
    """Largest multiple of 128 that divides `dim_padded` and is <= desired."""
    t = min(desired, dim_padded)
    t -= t % 128
    t = max(t, 128)
    while dim_padded % t:
        t -= 128
    return t


def _pad_to(x, shape):
    """Zero-pad `x` up to `shape` (no copy / no dtype change if already there)."""
    if tuple(x.shape) == tuple(shape):
        return x
    out = jnp.zeros(shape, x.dtype)
    return out.at[tuple(slice(0, s) for s in x.shape)].set(x)


def _physical_vmem_bytes():
    try:
        info = pltpu.get_tpu_info()
        v = getattr(info, "vmem_capacity_bytes", None)
        if v:
            return int(v)
    except Exception:
        pass
    return 64 * 2**20  # conservative (v7x per-TC)


def _vmem_limit(tile_bytes):
    # 2x headroom over the double-buffered working set, capped at 75% of
    # physical VMEM so Mosaic keeps room for internal scratch/semaphores
    # (important on v7x's 64 MiB; v5e/v6e get up to ~96 MiB).
    cap = (3 * _physical_vmem_bytes()) // 4
    want = max(32 * 2**20, 2 * int(tile_bytes))
    return int(min(cap, want))


def _pick_layer_block(num_layers, other_parallel_steps, desired):
    """Largest divisor of L that is <= desired, keeping >=2 parallel grid steps
    when possible (v7x has 2 TensorCores)."""
    limit = min(desired, num_layers)
    if other_parallel_steps < 2 and num_layers >= 2:
        limit = min(limit, num_layers // 2)
    limit = max(limit, 1)
    for d in range(limit, 0, -1):
        if num_layers % d == 0:
            return d
    return 1


# ---------------------------------------------------------------------------
# Matmul kernel body (shared by the 2-D single-layer and 3-D stacked paths).
#   units_ref : (tk, tn)       or (Lb, tk, tn)   -- activation applied here
#   w_ref     : (tm, tk)       or (Lb, tm, tk)
#   b_ref     : (tm, tn)       or (Lb, tm, tn)   -- folded into the k==0 init
#   out_ref   : (tm, tn)       or (Lb, tm, tn)
#   acc_refs  : optional f32 VMEM scratch; when absent (f32 output) the
#               accumulation happens directly in the resident output block.
# ---------------------------------------------------------------------------
def _pcn_kernel(units_ref, w_ref, b_ref, out_ref, *acc_refs, act, k_axis):
    acc_ref = acc_refs[0] if acc_refs else out_ref
    k = pl.program_id(k_axis)

    @pl.when(k == 0)
    def _init():
        # Bias folded into the accumulator init (one free VPU upcast per tile).
        acc_ref[...] = b_ref[...].astype(jnp.float32)

    u = units_ref[...]
    if act in _CHEAP_ACTS:
        a = _ACTIVATIONS[act](u)                       # stays in stored dtype
    else:
        a = _ACTIVATIONS[act](u.astype(jnp.float32))   # transcendentals in f32
    a = a.astype(w_ref.dtype)                          # MXU operand dtype

    if w_ref.ndim == 3:  # stacked: Lb small batched matmuls per grid step
        prod = jnp.einsum("lmk,lkn->lmn", w_ref[...], a,
                          preferred_element_type=jnp.float32)
    else:
        prod = jnp.dot(w_ref[...], a, preferred_element_type=jnp.float32)
    acc_ref[...] += prod

    if acc_refs:  # narrow output dtype: cast once on the last K step
        @pl.when(k == pl.num_programs(k_axis) - 1)
        def _finalize():
            out_ref[...] = acc_ref[...].astype(out_ref.dtype)


# ---------------------------------------------------------------------------
# Small elementwise pass used to hoist a transcendental activation when the
# units tile would otherwise be re-activated once per M tile.  Output is
# emitted directly in the MXU (weight) dtype.
# ---------------------------------------------------------------------------
def _act_kernel(x_ref, o_ref, *, act):
    o_ref[...] = _ACTIVATIONS[act](x_ref[...].astype(jnp.float32)).astype(o_ref.dtype)


def _activation_pass(x, act, out_dtype, *, tr=512, tc=512):
    shape = x.shape
    x2 = x.reshape((-1, shape[-1]))          # leading dims are 128-padded
    R, C = x2.shape
    trr, tcc = _pick_tile(R, tr), _pick_tile(C, tc)
    tile_bytes = 2 * trr * tcc * (x.dtype.itemsize + jnp.dtype(out_dtype).itemsize)
    y = pl.pallas_call(
        functools.partial(_act_kernel, act=act),
        out_shape=jax.ShapeDtypeStruct((R, C), out_dtype),
        grid_spec=pltpu.PrefetchScalarGridSpec(
            num_scalar_prefetch=0,
            grid=(R // trr, C // tcc),
            in_specs=[pl.BlockSpec((trr, tcc), lambda i, j: (i, j))],
            out_specs=pl.BlockSpec((trr, tcc), lambda i, j: (i, j)),
        ),
        compiler_params=pltpu.CompilerParams(
            dimension_semantics=("parallel", "parallel"),
            vmem_limit_bytes=_vmem_limit(tile_bytes),
        ),
    )(x2)
    return y.reshape(shape)


# ---------------------------------------------------------------------------
# Single-layer forward.
# ---------------------------------------------------------------------------
def pcn_preds_forward(units, weights, bias, act="relu", *,
                      tm=256, tn=None, tk=None, out_dtype=None):
    """units: (size, batch); weights: (target_dim, size); bias: (target_dim, batch).

    MXU operands use the STORED dtype of `weights` -- keep weights/units
    persistently in bf16 for the bandwidth-bound fast path.  Returns
    (target_dim, batch) in promote_types(weights, units, bias) unless
    `out_dtype` is given."""
    assert act in _ACTIVATIONS, f"unknown activation {act!r}"
    K, N = units.shape
    M, Kw = weights.shape
    assert Kw == K and bias.shape == (M, N)

    if out_dtype is None:
        out_dtype = jnp.promote_types(jnp.promote_types(weights.dtype, units.dtype),
                                      bias.dtype)
    out_dtype = jnp.dtype(out_dtype)

    big_vmem = _physical_vmem_bytes() >= 96 * 2**20
    if tk is None:
        tk = 4096 if big_vmem else 2048
    if tn is None:
        tn = 1024 if big_vmem else 512

    # Pad only to the 128 lane/tiling requirement; tiles divide the padded dims.
    Mp, Np, Kp = _round_up(M, 128), _round_up(N, 128), _round_up(K, 128)
    tm, tn, tk = _pick_tile(Mp, tm), _pick_tile(Np, tn), _pick_tile(Kp, tk)

    units_p = _pad_to(units, (Kp, Np))
    w_p = _pad_to(weights, (Mp, Kp))
    b_p = _pad_to(bias, (Mp, Np))

    kernel_act = act
    if Mp // tm > 1 and act not in _CHEAP_ACTS:
        units_p = _activation_pass(units_p, act, w_p.dtype)
        kernel_act = "identity"

    use_scratch = out_dtype != jnp.dtype(jnp.float32)
    grid = (Mp // tm, Np // tn, Kp // tk)
    tile_bytes = (2 * tk * tn * units_p.dtype.itemsize
                  + 2 * tm * tk * w_p.dtype.itemsize
                  + 2 * tm * tn * b_p.dtype.itemsize
                  + 2 * tm * tn * out_dtype.itemsize
                  + (tm * tn * 4 if use_scratch else 0))

    out_p = pl.pallas_call(
        functools.partial(_pcn_kernel, act=kernel_act, k_axis=2),
        out_shape=jax.ShapeDtypeStruct((Mp, Np), out_dtype),
        grid_spec=pltpu.PrefetchScalarGridSpec(
            num_scalar_prefetch=0,
            grid=grid,
            in_specs=[
                pl.BlockSpec((tk, tn), lambda i, j, k: (k, j)),   # units
                pl.BlockSpec((tm, tk), lambda i, j, k: (i, k)),   # weights
                pl.BlockSpec((tm, tn), lambda i, j, k: (i, j)),   # bias
            ],
            out_specs=pl.BlockSpec((tm, tn), lambda i, j, k: (i, j)),
            scratch_shapes=([pltpu.VMEM((tm, tn), jnp.float32)] if use_scratch else []),
        ),
        compiler_params=pltpu.CompilerParams(
            dimension_semantics=("parallel", "parallel", "arbitrary"),
            vmem_limit_bytes=_vmem_limit(tile_bytes),
        ),
    )(units_p, w_p, b_p)

    return out_p[:M, :N]


# ---------------------------------------------------------------------------
# Stacked forward: L independent PCN prediction layers fused into ONE
# pallas_call, with Lb layers per grid step (batched MXU matmul) to amortize
# per-step overhead at the module's tiny native shapes.
#   units: (L, size, batch); weights: (L, target_dim, size); bias: (L, target_dim, batch)
# ---------------------------------------------------------------------------
def pcn_preds_forward_stacked(units, weights, bias, act="relu", *,
                              tm=256, tn=None, tk=None, layer_block=8,
                              out_dtype=None):
    assert act in _ACTIVATIONS, f"unknown activation {act!r}"
    L, K, N = units.shape
    Lw, M, Kw = weights.shape
    assert Lw == L and Kw == K and bias.shape == (L, M, N)

    if out_dtype is None:
        out_dtype = jnp.promote_types(jnp.promote_types(weights.dtype, units.dtype),
                                      bias.dtype)
    out_dtype = jnp.dtype(out_dtype)

    big_vmem = _physical_vmem_bytes() >= 96 * 2**20
    if tk is None:
        tk = 4096 if big_vmem else 2048
    if tn is None:
        tn = 1024 if big_vmem else 512

    Mp, Np, Kp = _round_up(M, 128), _round_up(N, 128), _round_up(K, 128)
    tm, tn, tk = _pick_tile(Mp, tm), _pick_tile(Np, tn), _pick_tile(Kp, tk)
    grid_mn = (Mp // tm) * (Np // tn)
    Lb = _pick_layer_block(L, grid_mn, layer_block)

    units_p = _pad_to(units, (L, Kp, Np))
    w_p = _pad_to(weights, (L, Mp, Kp))
    b_p = _pad_to(bias, (L, Mp, Np))

    kernel_act = act
    if Mp // tm > 1 and act not in _CHEAP_ACTS:
        units_p = _activation_pass(units_p, act, w_p.dtype)
        kernel_act = "identity"

    use_scratch = out_dtype != jnp.dtype(jnp.float32)
    grid = (L // Lb, Mp // tm, Np // tn, Kp // tk)
    tile_bytes = Lb * (2 * tk * tn * units_p.dtype.itemsize
                       + 2 * tm * tk * w_p.dtype.itemsize
                       + 2 * tm * tn * b_p.dtype.itemsize
                       + 2 * tm * tn * out_dtype.itemsize
                       + (tm * tn * 4 if use_scratch else 0))

    out_p = pl.pallas_call(
        functools.partial(_pcn_kernel, act=kernel_act, k_axis=3),
        out_shape=jax.ShapeDtypeStruct((L, Mp, Np), out_dtype),
        grid_spec=pltpu.PrefetchScalarGridSpec(
            num_scalar_prefetch=0,
            grid=grid,
            in_specs=[
                pl.BlockSpec((Lb, tk, tn), lambda l, i, j, k: (l, k, j)),  # units
                pl.BlockSpec((Lb, tm, tk), lambda l, i, j, k: (l, i, k)),  # weights
                pl.BlockSpec((Lb, tm, tn), lambda l, i, j, k: (l, i, j)),  # bias
            ],
            out_specs=pl.BlockSpec((Lb, tm, tn), lambda l, i, j, k: (l, i, j)),
            scratch_shapes=([pltpu.VMEM((Lb, tm, tn), jnp.float32)]
                            if use_scratch else []),
        ),
        compiler_params=pltpu.CompilerParams(
            dimension_semantics=("parallel", "parallel", "parallel", "arbitrary"),
            vmem_limit_bytes=_vmem_limit(tile_bytes),
        ),
    )(units_p, w_p, b_p)

    return out_p[:, :M, :N]


# ---------------------------------------------------------------------------
# Pure-JAX references (match the PyTorch forward).
# ---------------------------------------------------------------------------
def pcn_preds_reference(units, weights, bias, act="relu"):
    return weights @ _ACTIVATIONS[act](units) + bias


def pcn_preds_reference_stacked(units, weights, bias, act="relu"):
    return jnp.einsum("lmk,lkn->lmn", weights, _ACTIVATIONS[act](units)) + bias


if __name__ == "__main__":
    key = jax.random.PRNGKey(0)
    ks = jax.random.split(key, 8)

    # --- 1) Module-native small shapes, f32 parameters (exact semantics).
    size, target_dim, batch = 32, 16, 8
    units = jax.random.normal(ks[0], (size, batch), dtype=jnp.float32)
    weights = jax.random.normal(ks[1], (target_dim, size), dtype=jnp.float32) * 0.1
    bias = jax.random.normal(ks[2], (target_dim, batch), dtype=jnp.float32) * 0.1

    for a in ("relu", "sigmoid", "tanh"):
        out = pcn_preds_forward(units, weights, bias, act=a)
        jax.block_until_ready(out)
        ref = pcn_preds_reference(units, weights, bias, act=a)
        assert out.shape == (target_dim, batch)
        assert jnp.allclose(out, ref, atol=1e-5, rtol=1e-5), f"mismatch for {a}"

    # --- 2) bf16 fast path: parameters stored persistently in bf16, so the
    #        wrapper does zero dtype casts and the weight HBM stream is halved.
    u16 = units.astype(jnp.bfloat16)
    w16 = weights.astype(jnp.bfloat16)
    b16 = bias.astype(jnp.bfloat16)
    out16 = pcn_preds_forward(u16, w16, b16, act="relu")
    jax.block_until_ready(out16)
    assert out16.dtype == jnp.bfloat16
    ref32 = pcn_preds_reference(units, weights, bias, act="relu")
    assert jnp.allclose(out16.astype(jnp.float32), ref32, atol=5e-2, rtol=5e-2)

    # --- 3) Multiple M tiles + transcendental activation: exercises the
    #        hoisted-activation elementwise pass.
    size3, target3, batch3 = 256, 384, 64
    u3 = jax.random.normal(ks[3], (size3, batch3), dtype=jnp.float32)
    w3 = jax.random.normal(ks[4], (target3, size3), dtype=jnp.float32) * 0.05
    b3 = jax.random.normal(ks[5], (target3, batch3), dtype=jnp.float32) * 0.05
    out3 = pcn_preds_forward(u3, w3, b3, act="sigmoid", tm=128)
    jax.block_until_ready(out3)
    ref3 = pcn_preds_reference(u3, w3, b3, act="sigmoid")
    assert out3.shape == (target3, batch3)
    assert jnp.allclose(out3, ref3, atol=2e-3, rtol=2e-3)

    # --- 4) Stacked: L layers fused in one pallas_call, layer axis blocked
    #        (Lb layers per grid step) while keeping >= 2 parallel grid steps.
    L, sizeL, targetL, batchL = 8, 128, 128, 128
    uL = jax.random.normal(ks[6], (L, sizeL, batchL), dtype=jnp.float32)
    wL = jax.random.normal(ks[7], (L, targetL, sizeL), dtype=jnp.float32) * 0.1
    bL = jnp.zeros((L, targetL, batchL), dtype=jnp.float32)
    outL = pcn_preds_forward_stacked(uL, wL, bL, act="tanh")
    jax.block_until_ready(outL)
    refL = pcn_preds_reference_stacked(uL, wL, bL, act="tanh")
    assert outL.shape == (L, targetL, batchL)
    assert jnp.allclose(outL, refL, atol=2e-3, rtol=2e-3)

    print("KERNEL_OK")
</pallas_src>

<mosaic_0001>
module attributes {stable_mosaic.version = 11 : i64} {
  func.func @_pcn_kernel(%arg0: i32, %arg1: i32, %arg2: i32, %arg3: memref<128x128xf32, #tpu.memory_space<vmem>>, %arg4: memref<128x128xf32, #tpu.memory_space<vmem>>, %arg5: memref<128x128xf32, #tpu.memory_space<vmem>>, %arg6: memref<128x128xf32, #tpu.memory_space<vmem>>) attributes {dimension_semantics = [#tpu.dimension_semantics<parallel>, #tpu.dimension_semantics<parallel>, #tpu.dimension_semantics<arbitrary>], iteration_bounds = array<i64: 1, 1, 1>, scalar_prefetch = 0 : i64, scratch_operands = 0 : i64, tpu.core_type = #tpu.core_type<tc>, window_params = [{transform_indices = @transform_0, window_bounds = array<i64: 128, 128>}, {transform_indices = @transform_1, window_bounds = array<i64: 128, 128>}, {transform_indices = @transform_2, window_bounds = array<i64: 128, 128>}, {transform_indices = @transform_3, window_bounds = array<i64: 128, 128>}]} {
    %c0_i32 = arith.constant 0 : i32
    %0 = arith.cmpi eq, %arg2, %c0_i32 : i32
    %1 = arith.extui %0 : i1 to i32
    %c0_i32_0 = arith.constant 0 : i32
    %2 = arith.cmpi ne, %1, %c0_i32_0 : i32
    scf.if %2 {
      %c0_9 = arith.constant 0 : index
      %c0_10 = arith.constant 0 : index
      %11 = vector.load %arg5[%c0_9, %c0_10] : memref<128x128xf32, #tpu.memory_space<vmem>>, vector<128x128xf32>
      %c0_11 = arith.constant 0 : index
      %c0_12 = arith.constant 0 : index
      %12 = vector.load %arg6[%c0_11, %c0_12] : memref<128x128xf32, #tpu.memory_space<vmem>>, vector<128x128xf32>
      tpu.vector_store %arg6[%c0_11, %c0_12], %11 {strides = array<i32>} : memref<128x128xf32, #tpu.memory_space<vmem>>, vector<128x128xf32>,
    } else {
    }
    %c0 = arith.constant 0 : index
    %c0_1 = arith.constant 0 : index
    %3 = vector.load %arg3[%c0, %c0_1] : memref<128x128xf32, #tpu.memory_space<vmem>>, vector<128x128xf32>
    %cst = arith.constant 0.000000e+00 : f32
    %4 = vector.broadcast %cst : f32 to vector<128x128xf32>
    %5 = arith.maximumf %3, %4 : vector<128x128xf32>
    %c0_2 = arith.constant 0 : index
    %c0_3 = arith.constant 0 : index
    %6 = vector.load %arg4[%c0_2, %c0_3] : memref<128x128xf32, #tpu.memory_space<vmem>>, vector<128x128xf32>
    %cst_4 = arith.constant dense<0.000000e+00> : vector<128x128xf32>
    %7 = tpu.matmul %6, %5, %cst_4 {dimension_numbers = #tpu.dot_dimension_numbers<[1], [0], [0], [1], [0, 0, 1, 1], [], []>} : vector<128x128xf32>, vector<128x128xf32>, vector<128x128xf32> -> vector<128x128xf32>
    %c0_5 = arith.constant 0 : index
    %c0_6 = arith.constant 0 : index
    %8 = vector.load %arg6[%c0_5, %c0_6] : memref<128x128xf32, #tpu.memory_space<vmem>>, vector<128x128xf32>
    %9 = arith.addf %8, %7 : vector<128x128xf32>
    %c0_7 = arith.constant 0 : index
    %c0_8 = arith.constant 0 : index
    %10 = vector.load %arg6[%c0_7, %c0_8] : memref<128x128xf32, #tpu.memory_space<vmem>>, vector<128x128xf32>
    tpu.vector_store %arg6[%c0_7, %c0_8], %9 {strides = array<i32>} : memref<128x128xf32, #tpu.memory_space<vmem>>, vector<128x128xf32>,
    return
  }
  func.func @transform_0(%arg0: i32, %arg1: i32, %arg2: i32) -> (i32, i32) {
    %c0_i32 = arith.constant 0 : i32
    return %arg2, %arg1 : i32, i32
  }
  func.func @transform_1(%arg0: i32, %arg1: i32, %arg2: i32) -> (i32, i32) {
    %c0_i32 = arith.constant 0 : i32
    return %arg0, %arg2 : i32, i32
  }
  func.func @transform_2(%arg0: i32, %arg1: i32, %arg2: i32) -> (i32, i32) {
    %c0_i32 = arith.constant 0 : i32
    return %arg0, %arg1 : i32, i32
  }
  func.func @transform_3(%arg0: i32, %arg1: i32, %arg2: i32) -> (i32, i32) {
    %c0_i32 = arith.constant 0 : i32
    return %arg0, %arg1 : i32, i32
  }
}

</mosaic_0001>

<llo_original>
// kernel: tpu_custom_call.1
$region0: #{tpu_custom_call.1}
  #allocation0 [shape = 'u32[]', space=smem, size = 0x4, offset = 0x4, fixed_abs, tag = 'smem constant byte address 0x4 - core index']
  #allocation1 [shape = 'u32[144,128]{1,0:T(1,128)}', space=vmem, size = 0x12000, scoped, tag = 'internal scratch']
  %s0 = inlined_call_operand.hbm [shape: f32[128,128], index: 0, kind: input, shape index: {}]
  %s1 = inlined_call_operand.hbm [shape: f32[128,128], index: 1, kind: input, shape index: {}]
  %s2 = inlined_call_operand.hbm [shape: f32[128,128], index: 2, kind: input, shape index: {}]
  %s3 = inlined_call_operand.hbm [shape: f32[128,128], index: 3, kind: output, shape index: {}]
  %s4 = sld [smem:[#allocation0]]
  $region38: #{tpu_custom_call.1} parent=0
    _
  %s6 = ssub.s32 1, %s4
  %s7 = scalar_select 0, %s6, %s4
  $region1: #{tpu_custom_call.1} parent=0
    #allocation2 [shape = 'u8[65536]{0}', space=vmem, size = 0x10000, scoped, tag = 'input window, operand 0, single buffered']
    #allocation3 [shape = 's32[1]{0}', space=sflag, size = 0x4, scoped, tag = 'scoped memory for tpu_custom_call.1']
    #allocation4 [shape = 's32[1]{0}', space=sflag, size = 0x4, scoped, tag = 'scoped memory for tpu_custom_call.1']
    #allocation5 [shape = 'u8[65536]{0}', space=vmem, size = 0x10000, scoped, tag = 'input window, operand 1, single buffered']
    #allocation6 [shape = 's32[1]{0}', space=sflag, size = 0x4, scoped, tag = 'scoped memory for tpu_custom_call.1']
    #allocation7 [shape = 'u8[65536]{0}', space=vmem, size = 0x10000, scoped, tag = 'input window, operand 2, single buffered']
    #allocation8 [shape = 'u8[65536]{0}', space=vmem, size = 0x10000, scoped, tag = 'output window, operand 0, single buffered']
    %8 = vsyncpa [#allocation3], 0
    %9 = vsyncpa [#allocation6], 0
    %10 = vsyncpa [#allocation4], 0
    // Predicated region
    $region2: #{tpu_custom_call.1} parent=1 // pred_check
      _
    $region3: #{tpu_custom_call.1} parent=1 // pred_check_branch
      %12 = sbr.rel (0) target = $region5
    $region4: #{tpu_custom_call.1} parent=1 // pred_region
      %s14 = ssub.s32 2048, 2048
      %15 = vsyncadd [#allocation3], %s14
      %s16 = sshll.u32 [#allocation2], 4
      %s17 = int_to_ptr.vmem [resolvable:$true] %s16
      %22 = dma.hbm_to_vmem [thread:$0]  %s0, 2048, %s17, [#allocation3], 128, 128, 8
    $region5: #{tpu_custom_call.1} parent=1 // pred_fallthru
      _
    // Predicated region
    $region6: #{tpu_custom_call.1} parent=1 // pred_check
      _
    $region7: #{tpu_custom_call.1} parent=1 // pred_check_branch
      %24 = sbr.rel (0) target = $region9
    $region8: #{tpu_custom_call.1} parent=1 // pred_region
      %s26 = ssub.s32 2048, 2048
      %27 = vsyncadd [#allocation6], %s26
      %s28 = sshll.u32 [#allocation5], 4
      %s29 = int_to_ptr.vmem [resolvable:$true] %s28
      %34 = dma.hbm_to_vmem [thread:$0]  %s1, 2048, %s29, [#allocation6], 128, 128, 8
    $region9: #{tpu_custom_call.1} parent=1 // pred_fallthru
      _
    // Predicated region
    $region10: #{tpu_custom_call.1} parent=1 // pred_check
      _
    $region11: #{tpu_custom_call.1} parent=1 // pred_check_branch
      %36 = sbr.rel (0) target = $region13
    $region12: #{tpu_custom_call.1} parent=1 // pred_region
      %s38 = ssub.s32 2048, 2048
      %39 = vsyncadd [#allocation6], %s38
      %s40 = sshll.u32 [#allocation7], 4
      %s41 = int_to_ptr.vmem [resolvable:$true] %s40
      %46 = dma.hbm_to_vmem [thread:$0]  %s2, 2048, %s41, [#allocation6], 128, 128, 8
    $region13: #{tpu_custom_call.1} parent=1 // pred_fallthru
      _
    // Predicated region
    $region14: #{tpu_custom_call.1} parent=1 // pred_check
      _
    $region15: #{tpu_custom_call.1} parent=1 // pred_check_branch
      %48 = sbr.rel (0) target = $region17
    $region16: #{tpu_custom_call.1} parent=1 // pred_region
      %49 = dma.done [#allocation3], 2048
    $region17: #{tpu_custom_call.1} parent=1 // pred_fallthru
      _
    // Predicated region
    $region18: #{tpu_custom_call.1} parent=1 // pred_check
      _
    $region19: #{tpu_custom_call.1} parent=1 // pred_check_branch
      %51 = sbr.rel (0) target = $region21
    $region20: #{tpu_custom_call.1} parent=1 // pred_region
      %52 = dma.done [#allocation6], 2048
    $region21: #{tpu_custom_call.1} parent=1 // pred_fallthru
      _
    // Predicated region
    $region22: #{tpu_custom_call.1} parent=1 // pred_check
      _
    $region23: #{tpu_custom_call.1} parent=1 // pred_check_branch
      %54 = sbr.rel (0) target = $region25
    $region24: #{tpu_custom_call.1} parent=1 // pred_region
      %55 = dma.done [#allocation6], 2048
    $region25: #{tpu_custom_call.1} parent=1 // pred_fallthru
      _
    %p56 = scmp.eq.s32.totalorder 0, 0
    // Predicated region
    $region26: #{tpu_custom_call.1} parent=1 // pred_check
      %p57 = pneg %p56
    $region27: #{tpu_custom_call.1} parent=1 // pred_check_branch
      %59 = sbr.rel (%p57) target = $region29
    $region28: #{tpu_custom_call.1} parent=1 // pred_region
      %v60 = vld [vmem:[#allocation7] sm:$0xff]
      %v61 = vld [vmem:[#allocation7 + $0x8] sm:$0xff]
      %v62 = vld [vmem:[#allocation7 + $0x10] sm:$0xff]
      %v63 = vld [vmem:[#allocation7 + $0x18] sm:$0xff]
      %v64 = vld [vmem:[#allocation7 + $0x20] sm:$0xff]
      %v65 = vld [vmem:[#allocation7 + $0x28] sm:$0xff]
      %v66 = vld [vmem:[#allocation7 + $0x30] sm:$0xff]
      %v67 = vld [vmem:[#allocation7 + $0x38] sm:$0xff]
      %v68 = vld [vmem:[#allocation7 + $0x40] sm:$0xff]
      %v69 = vld [vmem:[#allocation7 + $0x48] sm:$0xff]
      %v70 = vld [vmem:[#allocation7 + $0x50] sm:$0xff]
      %v71 = vld [vmem:[#allocation7 + $0x58] sm:$0xff]
      %v72 = vld [vmem:[#allocation7 + $0x60] sm:$0xff]
      %v73 = vld [vmem:[#allocation7 + $0x68] sm:$0xff]
      %v74 = vld [vmem:[#allocation7 + $0x70] sm:$0xff]
      %v75 = vld [vmem:[#allocation7 + $0x78] sm:$0xff]
      %76 = vst [vmem:[#allocation8] sm:$0xff] %v60
      %77 = vst [vmem:[#allocation8 + $0x8] sm:$0xff] %v61
      %78 = vst [vmem:[#allocation8 + $0x10] sm:$0xff] %v62
      %79 = vst [vmem:[#allocation8 + $0x18] sm:$0xff] %v63
      %80 = vst [vmem:[#allocation8 + $0x20] sm:$0xff] %v64
      %81 = vst [vmem:[#allocation8 + $0x28] sm:$0xff] %v65
      %82 = vst [vmem:[#allocation8 + $0x30] sm:$0xff] %v66
      %83 = vst [vmem:[#allocation8 + $0x38] sm:$0xff] %v67
      %84 = vst [vmem:[#allocation8 + $0x40] sm:$0xff] %v68
      %85 = vst [vmem:[#allocation8 + $0x48] sm:$0xff] %v69
      %86 = vst [vmem:[#allocation8 + $0x50] sm:$0xff] %v70
      %87 = vst [vmem:[#allocation8 + $0x58] sm:$0xff] %v71
      %88 = vst [vmem:[#allocation8 + $0x60] sm:$0xff] %v72
      %89 = vst [vmem:[#allocation8 + $0x68] sm:$0xff] %v73
      %90 = vst [vmem:[#allocation8 + $0x70] sm:$0xff] %v74
      %91 = vst [vmem:[#allocation8 + $0x78] sm:$0xff] %v75
    $region29: #{tpu_custom_call.1} parent=1 // pred_fallthru
      _
    %v92 = vld [vmem:[#allocation2] sm:$0xff]
    %v93 = vld [vmem:[#allocation2 + $0x8] sm:$0xff]
    %v94 = vld [vmem:[#allocation2 + $0x10] sm:$0xff]
    %v95 = vld [vmem:[#allocation2 + $0x18] sm:$0xff]
    %v96 = vld [vmem:[#allocation2 + $0x20] sm:$0xff]
    %v97 = vld [vmem:[#allocation2 + $0x28] sm:$0xff]
    %v98 = vld [vmem:[#allocation2 + $0x30] sm:$0xff]
    %v99 = vld [vmem:[#allocation2 + $0x38] sm:$0xff]
    %v100 = vld [vmem:[#allocation2 + $0x40] sm:$0xff]
    %v101 = vld [vmem:[#allocation2 + $0x48] sm:$0xff]
    %v102 = vld [vmem:[#allocation2 + $0x50] sm:$0xff]
    %v103 = vld [vmem:[#allocation2 + $0x58] sm:$0xff]
    %v104 = vld [vmem:[#allocation2 + $0x60] sm:$0xff]
    %v105 = vld [vmem:[#allocation2 + $0x68] sm:$0xff]
    %v106 = vld [vmem:[#allocation2 + $0x70] sm:$0xff]
    %v107 = vld [vmem:[#allocation2 + $0x78] sm:$0xff]
    %v108 = vmax.f32 %v92, 0.0
    %v109 = vmax.f32 %v93, 0.0
    %v110 = vmax.f32 %v94, 0.0
    %v111 = vmax.f32 %v95, 0.0
    %v112 = vmax.f32 %v96, 0.0
    %v113 = vmax.f32 %v97, 0.0
    %v114 = vmax.f32 %v98, 0.0
    %v115 = vmax.f32 %v99, 0.0
    %v116 = vmax.f32 %v100, 0.0
    %v117 = vmax.f32 %v101, 0.0
    %v118 = vmax.f32 %v102, 0.0
    %v119 = vmax.f32 %v103, 0.0
    %v120 = vmax.f32 %v104, 0.0
    %v121 = vmax.f32 %v105, 0.0
    %v122 = vmax.f32 %v106, 0.0
    %v123 = vmax.f32 %v107, 0.0
    %v124 = vld [vmem:[#allocation5] sm:$0xff]
    %v125 = vld [vmem:[#allocation5 + $0x8] sm:$0xff]
    %v126 = vld [vmem:[#allocation5 + $0x10] sm:$0xff]
    %v127 = vld [vmem:[#allocation5 + $0x18] sm:$0xff]
    %v128 = vld [vmem:[#allocation5 + $0x20] sm:$0xff]
    %v129 = vld [vmem:[#allocation5 + $0x28] sm:$0xff]
    %v130 = vld [vmem:[#allocation5 + $0x30] sm:$0xff]
    %v131 = vld [vmem:[#allocation5 + $0x38] sm:$0xff]
    %v132 = vld [vmem:[#allocation5 + $0x40] sm:$0xff]
    %v133 = vld [vmem:[#allocation5 + $0x48] sm:$0xff]
    %v134 = vld [vmem:[#allocation5 + $0x50] sm:$0xff]
    %v135 = vld [vmem:[#allocation5 + $0x58] sm:$0xff]
    %v136 = vld [vmem:[#allocation5 + $0x60] sm:$0xff]
    %v137 = vld [vmem:[#allocation5 + $0x68] sm:$0xff]
    %v138 = vld [vmem:[#allocation5 + $0x70] sm:$0xff]
    %v139 = vld [vmem:[#allocation5 + $0x78] sm:$0xff]
    %140 = vmatprep.subr.mxu0 0.0
    %141 = vmatpush1.msra.mxu0 %v108
    %142 = vmatprep.subr.mxu0 0.0
    %143 = vmatpush1.msra.mxu0 %v109
    %144 = vmatprep.subr.mxu0 0.0
    %145 = vmatpush1.msra.mxu0 %v110
    %146 = vmatprep.subr.mxu0 0.0
    %147 = vmatpush1.msra.mxu0 %v111
    %148 = vmatprep.subr.mxu0 0.0
    %149 = vmatpush1.msra.mxu0 %v112
    %150 = vmatprep.subr.mxu0 0.0
    %151 = vmatpush1.msra.mxu0 %v113
    %152 = vmatprep.subr.mxu0 0.0
    %153 = vmatpush1.msra.mxu0 %v114
    %154 = vmatprep.subr.mxu0 0.0
    %155 = vmatpush1.msra.mxu0 %v115
    %156 = vmatprep.subr.mxu0 0.0
    %157 = vmatpush1.msra.mxu0 %v116
    %158 = vmatprep.subr.mxu0 0.0
    %159 = vmatpush1.msra.mxu0 %v117
    %160 = vmatprep.subr.mxu0 0.0
    %161 = vmatpush1.msra.mxu0 %v118
    %162 = vmatprep.subr.mxu0 0.0
    %163 = vmatpush1.msra.mxu0 %v119
    %164 = vmatprep.subr.mxu0 0.0
    %165 = vmatpush1.msra.mxu0 %v120
    %166 = vmatprep.subr.mxu0 0.0
    %167 = vmatpush1.msra.mxu0 %v121
    %168 = vmatprep.subr.mxu0 0.0
    %169 = vmatpush1.msra.mxu0 %v122
    %170 = vmatprep.subr.mxu0 0.0
    %171 = vmatpush1.msra.mxu0 %v123
    %172 = vmatprep.subr.mxu0 0.0
    %173 = vmatpush1.msra.mxu0 0.0
    %174 = vmatprep.subr.mxu0 0.0
    %175 = vmatpush1.msra.mxu0 0.0
    %176 = vmatprep.subr.mxu0 0.0
    %177 = vmatpush1.msra.mxu0 0.0
    %178 = vmatprep.subr.mxu0 0.0
    %179 = vmatpush1.msra.mxu0 0.0
    %180 = vmatprep.subr.mxu0 0.0
    %181 = vmatpush1.msra.mxu0 0.0
    %182 = vmatprep.subr.mxu0 0.0
    %183 = vmatpush1.msra.mxu0 0.0
    %184 = vmatprep.subr.mxu0 0.0
    %185 = vmatpush1.msra.mxu0 0.0
    %186 = vmatprep.subr.mxu0 0.0
    %187 = vmatpush1.msra.mxu0 0.0
    %188 = vmatprep.subr.mxu0 0.0
    %189 = vmatpush1.msra.mxu0 0.0
    %190 = vmatprep.subr.mxu0 0.0
    %191 = vmatpush1.msra.mxu0 0.0
    %192 = vmatprep.subr.mxu0 0.0
    %193 = vmatpush1.msra.mxu0 0.0
    %194 = vmatprep.subr.mxu0 0.0
    %195 = vmatpush1.msra.mxu0 0.0
    %196 = vmatprep.subr.mxu0 0.0
    %197 = vmatpush1.msra.mxu0 0.0
    %198 = vmatprep.subr.mxu0 0.0
    %199 = vmatpush1.msra.mxu0 0.0
    %200 = vmatprep.subr.mxu0 0.0
    %201 = vmatpush1.msra.mxu0 0.0
    %202 = vmatprep.subr.mxu0 0.0
    %203 = vmatpush1.msra.mxu0 0.0
    %204 = vmatprep.mubr.f32.mxu0 0.0
    %205 = vmatmul.mubr.f32.gmra.mrb[0].mxu0 %v124
    %v206 = vpop.f32.mrb[0].mxu0
    %v207 = vadd.f32 0.0, %v206
    %v208 = vpop.f32.mrb[0].mxu0
    %209 = vmatprep.mubr.f32.mxu0 0.0
    %210 = vmatmul.mubr.f32.gmra.mrb[0].mxu0 %v125
    %v211 = vpop.f32.mrb[0].mxu0
    %v212 = vadd.f32 0.0, %v211
    %v213 = vpop.f32.mrb[0].mxu0
    %214 = vmatprep.mubr.f32.mxu0 0.0
    %215 = vmatmul.mubr.f32.gmra.mrb[0].mxu0 %v126
    %v216 = vpop.f32.mrb[0].mxu0
    %v217 = vadd.f32 0.0, %v216
    %v218 = vpop.f32.mrb[0].mxu0
    %219 = vmatprep.mubr.f32.mxu0 0.0
    %220 = vmatmul.mubr.f32.gmra.mrb[0].mxu0 %v127
    %v221 = vpop.f32.mrb[0].mxu0
    %v222 = vadd.f32 0.0, %v221
    %v223 = vpop.f32.mrb[0].mxu0
    %224 = vmatprep.mubr.f32.mxu0 0.0
    %225 = vmatmul.mubr.f32.gmra.mrb[0].mxu0 %v128
    %v226 = vpop.f32.mrb[0].mxu0
    %v227 = vadd.f32 0.0, %v226
    %v228 = vpop.f32.mrb[0].mxu0
    %229 = vmatprep.mubr.f32.mxu0 0.0
    %230 = vmatmul.mubr.f32.gmra.mrb[0].mxu0 %v129
    %v231 = vpop.f32.mrb[0].mxu0
    %v232 = vadd.f32 0.0, %v231
    %v233 = vpop.f32.mrb[0].mxu0
    %234 = vmatprep.mubr.f32.mxu0 0.0
    %235 = vmatmul.mubr.f32.gmra.mrb[0].mxu0 %v130
    %v236 = vpop.f32.mrb[0].mxu0
    %v237 = vadd.f32 0.0, %v236
    %v238 = vpop.f32.mrb[0].mxu0
    %239 = vmatprep.mubr.f32.mxu0 0.0
    %240 = vmatmul.mubr.f32.gmra.mrb[0].mxu0 %v131
    %v241 = vpop.f32.mrb[0].mxu0
    %v242 = vadd.f32 0.0, %v241
    %v243 = vpop.f32.mrb[0].mxu0
    %244 = vmatprep.mubr.f32.mxu0 0.0
    %245 = vmatmul.mubr.f32.gmra.mrb[0].mxu0 %v132
    %v246 = vpop.f32.mrb[0].mxu0
    %v247 = vadd.f32 0.0, %v246
    %v248 = vpop.f32.mrb[0].mxu0
    %249 = vmatprep.mubr.f32.mxu0 0.0
    %250 = vmatmul.mubr.f32.gmra.mrb[0].mxu0 %v133
    %v251 = vpop.f32.mrb[0].mxu0
    %v252 = vadd.f32 0.0, %v251
    %v253 = vpop.f32.mrb[0].mxu0
    %254 = vmatprep.mubr.f32.mxu0 0.0
    %255 = vmatmul.mubr.f32.gmra.mrb[0].mxu0 %v134
    %v256 = vpop.f32.mrb[0].mxu0
    %v257 = vadd.f32 0.0, %v256
    %v258 = vpop.f32.mrb[0].mxu0
    %259 = vmatprep.mubr.f32.mxu0 0.0
    %260 = vmatmul.mubr.f32.gmra.mrb[0].mxu0 %v135
    %v261 = vpop.f32.mrb[0].mxu0
    %v262 = vadd.f32 0.0, %v261
    %v263 = vpop.f32.mrb[0].mxu0
    %264 = vmatprep.mubr.f32.mxu0 0.0
    %265 = vmatmul.mubr.f32.gmra.mrb[0].mxu0 %v136
    %v266 = vpop.f32.mrb[0].mxu0
    %v267 = vadd.f32 0.0, %v266
    %v268 = vpop.f32.mrb[0].mxu0
    %269 = vmatprep.mubr.f32.mxu0 0.0
    %270 = vmatmul.mubr.f32.gmra.mrb[0].mxu0 %v137
    %v271 = vpop.f32.mrb[0].mxu0
    %v272 = vadd.f32 0.0, %v271
    %v273 = vpop.f32.mrb[0].mxu0
    %274 = vmatprep.mubr.f32.mxu0 0.0
    %275 = vmatmul.mubr.f32.gmra.mrb[0].mxu0 %v138
    %v276 = vpop.f32.mrb[0].mxu0
    %v277 = vadd.f32 0.0, %v276
    %v278 = vpop.f32.mrb[0].mxu0
    %279 = vmatprep.mubr.f32.mxu0 0.0
    %280 = vmatmul.mubr.f32.gmra.mrb[0].mxu0 %v139
    %v281 = vpop.f32.mrb[0].mxu0
    %v282 = vadd.f32 0.0, %v281
    %v283 = vpop.f32.mrb[0].mxu0
    %284 = vdwg.mxu0
    %v285 = vld [vmem:[#allocation8] sm:$0xff]
    %v286 = vld [vmem:[#allocation8 + $0x8] sm:$0xff]
    %v287 = vld [vmem:[#allocation8 + $0x10] sm:$0xff]
    %v288 = vld [vmem:[#allocation8 + $0x18] sm:$0xff]
    %v289 = vld [vmem:[#allocation8 + $0x20] sm:$0xff]
    %v290 = vld [vmem:[#allocation8 + $0x28] sm:$0xff]
    %v291 = vld [vmem:[#allocation8 + $0x30] sm:$0xff]
    %v292 = vld [vmem:[#allocation8 + $0x38] sm:$0xff]
    %v293 = vld [vmem:[#allocation8 + $0x40] sm:$0xff]
    %v294 = vld [vmem:[#allocation8 + $0x48] sm:$0xff]
    %v295 = vld [vmem:[#allocation8 + $0x50] sm:$0xff]
    %v296 = vld [vmem:[#allocation8 + $0x58] sm:$0xff]
    %v297 = vld [vmem:[#allocation8 + $0x60] sm:$0xff]
    %v298 = vld [vmem:[#allocation8 + $0x68] sm:$0xff]
    %v299 = vld [vmem:[#allocation8 + $0x70] sm:$0xff]
    %v300 = vld [vmem:[#allocation8 + $0x78] sm:$0xff]
    %v301 = vadd.f32 %v285, %v207
    %v302 = vadd.f32 %v286, %v212
    %v303 = vadd.f32 %v287, %v217
    %v304 = vadd.f32 %v288, %v222
    %v305 = vadd.f32 %v289, %v227
    %v306 = vadd.f32 %v290, %v232
    %v307 = vadd.f32 %v291, %v237
    %v308 = vadd.f32 %v292, %v242
    %v309 = vadd.f32 %v293, %v247
    %v310 = vadd.f32 %v294, %v252
    %v311 = vadd.f32 %v295, %v257
    %v312 = vadd.f32 %v296, %v262
    %v313 = vadd.f32 %v297, %v267
    %v314 = vadd.f32 %v298, %v272
    %v315 = vadd.f32 %v299, %v277
    %v316 = vadd.f32 %v300, %v282
    %317 = vst [vmem:[#allocation8] sm:$0xff] %v301
    %318 = vst [vmem:[#allocation8 + $0x8] sm:$0xff] %v302
    %319 = vst [vmem:[#allocation8 + $0x10] sm:$0xff] %v303
    %320 = vst [vmem:[#allocation8 + $0x18] sm:$0xff] %v304
    %321 = vst [vmem:[#allocation8 + $0x20] sm:$0xff] %v305
    %322 = vst [vmem:[#allocation8 + $0x28] sm:$0xff] %v306
    %323 = vst [vmem:[#allocation8 + $0x30] sm:$0xff] %v307
    %324 = vst [vmem:[#allocation8 + $0x38] sm:$0xff] %v308
    %325 = vst [vmem:[#allocation8 + $0x40] sm:$0xff] %v309
    %326 = vst [vmem:[#allocation8 + $0x48] sm:$0xff] %v310
    %327 = vst [vmem:[#allocation8 + $0x50] sm:$0xff] %v311
    %328 = vst [vmem:[#allocation8 + $0x58] sm:$0xff] %v312
    %329 = vst [vmem:[#allocation8 + $0x60] sm:$0xff] %v313
    %330 = vst [vmem:[#allocation8 + $0x68] sm:$0xff] %v314
    %331 = vst [vmem:[#allocation8 + $0x70] sm:$0xff] %v315
    %332 = vst [vmem:[#allocation8 + $0x78] sm:$0xff] %v316
    // Predicated region
    $region30: #{tpu_custom_call.1} parent=1 // pred_check
      _
    $region31: #{tpu_custom_call.1} parent=1 // pred_check_branch
      %334 = sbr.rel (0) target = $region33
    $region32: #{tpu_custom_call.1} parent=1 // pred_region
      %s336 = ssub.s32 2048, 2048
      %337 = vsyncadd [#allocation4], %s336
      %s338 = sshll.u32 [#allocation8], 4
      %s339 = int_to_ptr.vmem [resolvable:$true] %s338
      %344 = dma.vmem_to_hbm [thread:$0]  %s339, 2048, %s3, [#allocation4], 128, 128, 8
    $region33: #{tpu_custom_call.1} parent=1 // pred_fallthru
      _
    // Predicated region
    $region34: #{tpu_custom_call.1} parent=1 // pred_check
      _
    $region35: #{tpu_custom_call.1} parent=1 // pred_check_branch
      %346 = sbr.rel (0) target = $region37
    $region36: #{tpu_custom_call.1} parent=1 // pred_region
      %347 = dma.done [#allocation4], 2048
    $region37: #{tpu_custom_call.1} parent=1 // pred_fallthru
      _
    %348 = vsyncpa [#allocation3], 1
    %349 = vsyncpa [#allocation6], 1
    %350 = vsyncpa [#allocation4], 1

</llo_original>
